<compile_context>
chip_gen: v6e
topology: v6e:2x2x1
jax: 0.10.0
libtpu: 0.0.40
codegen_flags: <defaults>
</compile_context>

<pallas_src>
import functools
import math

import jax
import jax.numpy as jnp
from jax.experimental import pallas as pl
from jax.experimental.pallas import tpu as pltpu


def _attn_kernel(q_ref, k_ref, v_ref, out_ref, *maybe_attn_ref,
                 scale, mxu_dtype):
    # Block shapes: q (gh, tq, Dk), k (gh, Lk, Dk), v (gh, Lk, Dv).
    # Fold 1/temperature into q (Dk-wide mul) instead of scaling scores.
    q = (q_ref[...].astype(jnp.float32) * scale).astype(mxu_dtype)
    k = k_ref[...].astype(mxu_dtype)
    v = v_ref[...].astype(mxu_dtype)

    # scores[h, i, j] = sum_d q[h, i, d] * k[h, j, d]
    # Native 'bqd,bkd->bqk' form: contract Dk, batch over heads (no k.T).
    scores = jax.lax.dot_general(
        q, k,
        dimension_numbers=(((2,), (2,)), ((0,), (0,))),
        preferred_element_type=jnp.float32,
    )

    # Numerically stable softmax over Lk, kept in f32
    # (v5e has no bf16 VPU/EUP datapath; f32 elementwise is the right split).
    m = jnp.max(scores, axis=-1, keepdims=True)
    e = jnp.exp(scores - m)
    denom = jnp.sum(e, axis=-1, keepdims=True)
    # Exact reciprocal: only (gh, tq, 1) elements, keeps attn rows summing to 1.
    recip = pl.reciprocal(denom, approx=False)

    # TODO(synk): attn_dropout=0.1 is identity in eval mode; training-mode
    # dropout would use pltpu.prng_seed + pltpu.prng_random_bits here.

    # Un-normalized e feeds the MXU; normalize the small (tq, Dv) accumulator
    # afterwards so the MXU isn't gated on the (tq, Lk) normalize.
    out = jax.lax.dot_general(
        e.astype(mxu_dtype), v,
        dimension_numbers=(((2,), (1,)), ((0,), (0,))),
        preferred_element_type=jnp.float32,
    )
    out_ref[...] = (out * recip).astype(out_ref.dtype)

    if maybe_attn_ref:
        attn_ref = maybe_attn_ref[0]
        attn_ref[...] = (e * recip).astype(attn_ref.dtype)


def _divisors_desc(n):
    return [d for d in range(n, 0, -1) if n % d == 0]


def _vmem_capacity_bytes():
    """Physical VMEM of the attached TPU generation (conservative fallback)."""
    try:
        info = pltpu.get_tpu_info()
        cap = getattr(info, "vmem_capacity_bytes", None)
        if cap:
            return int(cap)
    except Exception:
        pass
    return 64 * 1024 * 1024  # v7x-per-TC-sized fallback: never over-commit


def _pick_q_tile(Lq_pad, per_step_bytes, budget, cap=512):
    """Largest divisor of Lq_pad (multiple of 8, <= cap) whose single-head
    per-step footprint fits the VMEM budget."""
    for d in _divisors_desc(Lq_pad):
        if d % 8 == 0 and d <= cap and per_step_bytes(1, d) <= budget:
            return d
    return min(Lq_pad, 8)  # Lq_pad is a multiple of 8; smallest legal tile


def _pick_heads_per_block(BH, tq, per_step_bytes, budget):
    """Largest divisor of BH that fits the per-step VMEM budget while leaving
    >= 2 head groups, so v7x's two TensorCores split along the head axis only
    (keeps K/V blocks resident per core across q-tiles)."""
    for gh in _divisors_desc(BH):
        if per_step_bytes(gh, tq) <= budget and (BH // gh >= 2 or BH < 2):
            return gh
    return 1


def scaled_dot_product_attention(q, k, v, presence=None, *, temperature,
                                 prefer_bf16_matmul=True,
                                 attn_dtype=None,
                                 return_attn=True):
    """q: (B,H,Lq,Dk), k: (B,H,Lk,Dk), v: (B,H,Lk,Dv).

    Returns (output, attn) like the PyTorch module, or just `output` when
    return_attn=False (skips the dominant (B,H,Lq,Lk) HBM writeback).

    prefer_bf16_matmul=True runs both matmuls bf16 -> f32-accumulate on the
    MXU for f32 callers (~1e-3 numerics delta); set False for strict parity.
    attn_dtype (e.g. jnp.bfloat16) halves the attention-matrix writeback.
    """
    del presence  # unused in the reference forward pass

    B, H, Lq, Dk = q.shape
    _, _, Lk, _ = k.shape
    Dv = v.shape[-1]
    BH = B * H

    out_dtype = q.dtype
    attn_dtype = jnp.dtype(out_dtype if attn_dtype is None else attn_dtype)
    in_dtype = jnp.dtype(q.dtype)
    if prefer_bf16_matmul and in_dtype == jnp.float32:
        mxu_dtype = jnp.bfloat16
    else:
        mxu_dtype = in_dtype

    # Fuse (B, H) so several heads can share one grid step.
    q3 = q.reshape(BH, Lq, Dk)
    k3 = k.reshape(BH, Lk, Dk)
    v3 = v.reshape(BH, Lk, Dv)

    # Pad Lq to a sublane multiple (128 granule for long sequences) so there
    # is always a tq choice that keeps the (tq, Lk) intermediates in budget.
    granule = 8 if Lq <= 512 else 128
    Lq_pad = ((Lq + granule - 1) // granule) * granule
    if Lq_pad != Lq:
        q3 = jnp.pad(q3, ((0, 0), (0, Lq_pad - Lq), (0, 0)))

    in_isz = in_dtype.itemsize
    out_isz = jnp.dtype(out_dtype).itemsize
    attn_isz = attn_dtype.itemsize
    mxu_isz = jnp.dtype(mxu_dtype).itemsize

    def per_step_bytes(gh, tq):
        # Double-buffered pipeline blocks (HBM <-> VMEM).
        io = gh * ((tq * Dk + Lk * Dk + Lk * Dv) * in_isz + tq * Dv * out_isz)
        if return_attn:
            io += gh * tq * Lk * attn_isz
        io *= 2
        # In-kernel intermediates (single copy each).
        interm = gh * (
            2 * tq * Lk * 4                               # f32 scores + e
            + tq * Lk * mxu_isz                           # e copy fed to MXU
            + tq * Dv * 4                                 # f32 out accumulator
            + (tq * Dk + Lk * Dk + Lk * Dv) * mxu_isz     # q/k/v MXU copies
        )
        if return_attn:
            interm += gh * tq * Lk * 4                    # normalized probs
        return io + interm

    vmem_cap = _vmem_capacity_bytes()
    step_budget = vmem_cap // 5   # ~25 MiB on 128 MiB parts, ~12 MiB on v7x
    vmem_limit = vmem_cap // 2    # 64 MiB on v5e/v6e, 32 MiB on v7x/fallback

    tq = _pick_q_tile(Lq_pad, per_step_bytes, step_budget)
    n_q_tiles = Lq_pad // tq
    gh = _pick_heads_per_block(BH, tq, per_step_bytes, step_budget)

    grid = (BH // gh, n_q_tiles)
    kernel = functools.partial(_attn_kernel,
                               scale=1.0 / float(temperature),
                               mxu_dtype=mxu_dtype)

    in_specs = [
        pl.BlockSpec((gh, tq, Dk), lambda g, i: (g, i, 0)),
        pl.BlockSpec((gh, Lk, Dk), lambda g, i: (g, 0, 0)),
        pl.BlockSpec((gh, Lk, Dv), lambda g, i: (g, 0, 0)),
    ]
    out_shapes = [jax.ShapeDtypeStruct((BH, Lq_pad, Dv), out_dtype)]
    out_specs = [pl.BlockSpec((gh, tq, Dv), lambda g, i: (g, i, 0))]
    if return_attn:
        out_shapes.append(jax.ShapeDtypeStruct((BH, Lq_pad, Lk), attn_dtype))
        out_specs.append(pl.BlockSpec((gh, tq, Lk), lambda g, i: (g, i, 0)))
    # TODO(synk): when return_attn=False and Lk is very long, an online-softmax
    # (flash) variant could additionally tile Lk; not needed at these sizes.
    # TODO(synk): for Dv/Lk < 128 a lane-dense head-folded output layout would
    # avoid masked vst.msk partial stores; skipped to keep layouts simple.

    flops = 2 * BH * Lq_pad * Lk * (Dk + Dv)
    bytes_accessed = (BH * (Lq_pad * Dk + Lk * Dk + Lk * Dv) * in_isz
                      + BH * Lq_pad * Dv * out_isz
                      + (BH * Lq_pad * Lk * attn_isz if return_attn else 0))
    cost = pl.CostEstimate(flops=flops,
                           transcendentals=BH * Lq_pad * Lk,
                           bytes_accessed=bytes_accessed)

    results = pl.pallas_call(
        kernel,
        out_shape=tuple(out_shapes),
        grid=grid,
        in_specs=in_specs,
        out_specs=tuple(out_specs),
        compiler_params=pltpu.CompilerParams(
            # Megacore split along heads only: each TensorCore keeps its K/V
            # blocks resident while sweeping its q-tiles (no duplicated DMAs).
            dimension_semantics=("parallel", "arbitrary"),
            vmem_limit_bytes=vmem_limit,
        ),
        cost_estimate=cost,
    )(q3, k3, v3)

    out3 = results[0][:, :Lq, :].reshape(B, H, Lq, Dv)
    if not return_attn:
        return out3
    attn3 = results[1][:, :Lq, :].reshape(B, H, Lq, Lk)
    return out3, attn3


def _reference(q, k, v, temperature):
    attn = jax.nn.softmax(
        jnp.matmul(q / temperature, jnp.swapaxes(k, 2, 3)), axis=-1)
    out = jnp.matmul(attn, v)
    return out, attn


if __name__ == "__main__":
    B, H, L, D = 2, 4, 8, 32  # batch, heads, seq, head-dim
    temperature = math.sqrt(D)

    key = jax.random.PRNGKey(0)
    kq, kk, kv = jax.random.split(key, 3)
    q = jax.random.normal(kq, (B, H, L, D), dtype=jnp.float32)
    k = jax.random.normal(kk, (B, H, L, D), dtype=jnp.float32)
    v = jax.random.normal(kv, (B, H, L, D), dtype=jnp.float32)
    presence = jnp.ones((B, H, L), dtype=jnp.float32)  # unused, like PyTorch

    out_ref, attn_ref = _reference(q, k, v, temperature)

    # Default (bf16 MXU fast path) — looser tolerance for the bf16 matmuls.
    out, attn = scaled_dot_product_attention(
        q, k, v, presence, temperature=temperature)
    jax.block_until_ready((out, attn))
    assert out.shape == (B, H, L, D) and attn.shape == (B, H, L, L)
    assert jnp.allclose(out, out_ref, atol=3e-2, rtol=3e-2)
    assert jnp.allclose(attn, attn_ref, atol=3e-2, rtol=3e-2)

    # Strict f32 MXU path (PyTorch-parity numerics).
    out32, attn32 = scaled_dot_product_attention(
        q, k, v, presence, temperature=temperature, prefer_bf16_matmul=False)
    jax.block_until_ready((out32, attn32))
    assert jnp.allclose(out32, out_ref, atol=2e-3, rtol=2e-3)
    assert jnp.allclose(attn32, attn_ref, atol=2e-3, rtol=2e-3)

    # attn-free fast path (skips the (B,H,Lq,Lk) HBM writeback entirely).
    out_fast = scaled_dot_product_attention(
        q, k, v, presence, temperature=temperature, return_attn=False)
    jax.block_until_ready(out_fast)
    assert jnp.allclose(out_fast, out_ref, atol=3e-2, rtol=3e-2)

    print("KERNEL_OK")
</pallas_src>

<mosaic_0001>
module attributes {stable_mosaic.version = 11 : i64} {
  func.func @_attn_kernel(%arg0: i32, %arg1: i32, %arg2: memref<4x8x32xf32, #tpu.memory_space<vmem>>, %arg3: memref<4x8x32xf32, #tpu.memory_space<vmem>>, %arg4: memref<4x8x32xf32, #tpu.memory_space<vmem>>, %arg5: memref<4x8x32xf32, #tpu.memory_space<vmem>>, %arg6: memref<4x8x8xf32, #tpu.memory_space<vmem>>) attributes {dimension_semantics = [#tpu.dimension_semantics<parallel>, #tpu.dimension_semantics<arbitrary>], iteration_bounds = array<i64: 2, 1>, scalar_prefetch = 0 : i64, scratch_operands = 0 : i64, tpu.core_type = #tpu.core_type<tc>, window_params = [{transform_indices = @transform_0, window_bounds = array<i64: 4, 8, 32>}, {transform_indices = @transform_1, window_bounds = array<i64: 4, 8, 32>}, {transform_indices = @transform_2, window_bounds = array<i64: 4, 8, 32>}, {transform_indices = @transform_3, window_bounds = array<i64: 4, 8, 32>}, {transform_indices = @transform_4, window_bounds = array<i64: 4, 8, 8>}]} {
    %c0 = arith.constant 0 : index
    %c0_0 = arith.constant 0 : index
    %c0_1 = arith.constant 0 : index
    %0 = vector.load %arg2[%c0, %c0_0, %c0_1] : memref<4x8x32xf32, #tpu.memory_space<vmem>>, vector<4x8x32xf32>
    %cst = arith.constant 0.176776692 : f32
    %1 = vector.broadcast %cst : f32 to vector<4x8x32xf32>
    %2 = arith.mulf %0, %1 : vector<4x8x32xf32>
    %3 = arith.truncf %2 : vector<4x8x32xf32> to vector<4x8x32xbf16>
    %c0_2 = arith.constant 0 : index
    %c0_3 = arith.constant 0 : index
    %c0_4 = arith.constant 0 : index
    %4 = vector.load %arg3[%c0_2, %c0_3, %c0_4] : memref<4x8x32xf32, #tpu.memory_space<vmem>>, vector<4x8x32xf32>
    %5 = arith.truncf %4 : vector<4x8x32xf32> to vector<4x8x32xbf16>
    %c0_5 = arith.constant 0 : index
    %c0_6 = arith.constant 0 : index
    %c0_7 = arith.constant 0 : index
    %6 = vector.load %arg4[%c0_5, %c0_6, %c0_7] : memref<4x8x32xf32, #tpu.memory_space<vmem>>, vector<4x8x32xf32>
    %7 = arith.truncf %6 : vector<4x8x32xf32> to vector<4x8x32xbf16>
    %cst_8 = arith.constant dense<0.000000e+00> : vector<4x8x8xf32>
    %8 = tpu.matmul %3, %5, %cst_8 {dimension_numbers = #tpu.dot_dimension_numbers<[2], [2], [1], [1], [0, 0, 0, 1, 1, 1], [0], [0]>} : vector<4x8x32xbf16>, vector<4x8x32xbf16>, vector<4x8x8xf32> -> vector<4x8x8xf32>
    %cst_9 = arith.constant dense<0xFF800000> : vector<4x8xf32>
    %9 = vector.multi_reduction <maximumf>, %8, %cst_9 [2] : vector<4x8x8xf32> to vector<4x8xf32>
    %10 = vector.shape_cast %9 : vector<4x8xf32> to vector<4x8x1xf32>
    %11 = vector.broadcast %10 : vector<4x8x1xf32> to vector<4x8x8xf32>
    %12 = arith.subf %8, %11 : vector<4x8x8xf32>
    %13 = math.exp %12 : vector<4x8x8xf32>
    %cst_10 = arith.constant dense<0.000000e+00> : vector<4x8xf32>
    %14 = vector.multi_reduction <add>, %13, %cst_10 [2] : vector<4x8x8xf32> to vector<4x8xf32>
    %15 = vector.shape_cast %14 : vector<4x8xf32> to vector<4x8x1xf32>
    %16 = tpu.reciprocal %15 : vector<4x8x1xf32> -> vector<4x8x1xf32>
    %17 = arith.truncf %13 : vector<4x8x8xf32> to vector<4x8x8xbf16>
    %cst_11 = arith.constant dense<0.000000e+00> : vector<4x8x32xf32>
    %18 = tpu.matmul %17, %7, %cst_11 {dimension_numbers = #tpu.dot_dimension_numbers<[2], [1], [1], [2], [0, 0, 0, 1, 1, 2], [0], [0]>} : vector<4x8x8xbf16>, vector<4x8x32xbf16>, vector<4x8x32xf32> -> vector<4x8x32xf32>
    %19 = vector.broadcast %16 : vector<4x8x1xf32> to vector<4x8x32xf32>
    %20 = arith.mulf %18, %19 : vector<4x8x32xf32>
    %c0_12 = arith.constant 0 : index
    %c0_13 = arith.constant 0 : index
    %c0_14 = arith.constant 0 : index
    %21 = vector.load %arg5[%c0_12, %c0_13, %c0_14] : memref<4x8x32xf32, #tpu.memory_space<vmem>>, vector<4x8x32xf32>
    tpu.vector_store %arg5[%c0_12, %c0_13, %c0_14], %20 {strides = array<i32>} : memref<4x8x32xf32, #tpu.memory_space<vmem>>, vector<4x8x32xf32>,
    %22 = vector.broadcast %16 : vector<4x8x1xf32> to vector<4x8x8xf32>
    %23 = arith.mulf %13, %22 : vector<4x8x8xf32>
    %c0_15 = arith.constant 0 : index
    %c0_16 = arith.constant 0 : index
    %c0_17 = arith.constant 0 : index
    %24 = vector.load %arg6[%c0_15, %c0_16, %c0_17] : memref<4x8x8xf32, #tpu.memory_space<vmem>>, vector<4x8x8xf32>
    tpu.vector_store %arg6[%c0_15, %c0_16, %c0_17], %23 {strides = array<i32>} : memref<4x8x8xf32, #tpu.memory_space<vmem>>, vector<4x8x8xf32>,
    return
  }
  func.func @transform_0(%arg0: i32, %arg1: i32) -> (i32, i32, i32) {
    %c0_i32 = arith.constant 0 : i32
    %c0_i32_0 = arith.constant 0 : i32
    return %arg0, %arg1, %c0_i32 : i32, i32, i32
  }
  func.func @transform_1(%arg0: i32, %arg1: i32) -> (i32, i32, i32) {
    %c0_i32 = arith.constant 0 : i32
    %c0_i32_0 = arith.constant 0 : i32
    %c0_i32_1 = arith.constant 0 : i32
    return %arg0, %c0_i32, %c0_i32_0 : i32, i32, i32
  }
  func.func @transform_2(%arg0: i32, %arg1: i32) -> (i32, i32, i32) {
    %c0_i32 = arith.constant 0 : i32
    %c0_i32_0 = arith.constant 0 : i32
    %c0_i32_1 = arith.constant 0 : i32
    return %arg0, %c0_i32, %c0_i32_0 : i32, i32, i32
  }
  func.func @transform_3(%arg0: i32, %arg1: i32) -> (i32, i32, i32) {
    %c0_i32 = arith.constant 0 : i32
    %c0_i32_0 = arith.constant 0 : i32
    return %arg0, %arg1, %c0_i32 : i32, i32, i32
  }
  func.func @transform_4(%arg0: i32, %arg1: i32) -> (i32, i32, i32) {
    %c0_i32 = arith.constant 0 : i32
    %c0_i32_0 = arith.constant 0 : i32
    return %arg0, %arg1, %c0_i32 : i32, i32, i32
  }
}

</mosaic_0001>

<llo_original>
// kernel: tpu_custom_call.1
$region0: #{tpu_custom_call.1}
  #allocation0 [shape = 'u32[]', space=smem, size = 0x4, offset = 0x4, fixed_abs, tag = 'smem constant byte address 0x4 - core index']
  #allocation1 [shape = 'u32[144,128]{1,0:T(1,128)}', space=vmem, size = 0x12000, scoped, tag = 'internal scratch']
  %s0 = inlined_call_operand.hbm [shape: f32[8,8,32], index: 0, kind: input, shape index: {}]
  %s1 = inlined_call_operand.hbm [shape: f32[8,8,32], index: 1, kind: input, shape index: {}]
  %s2 = inlined_call_operand.hbm [shape: f32[8,8,32], index: 2, kind: input, shape index: {}]
  %s3 = inlined_call_operand.hbm [shape: f32[8,8,32], index: 3, kind: output, shape index: {0}]
  %s4 = inlined_call_operand.hbm [shape: f32[8,8,8], index: 4, kind: output, shape index: {1}]
  %5 = xla_tuple %s3, %s4
  %s6 = sld [smem:[#allocation0]]
  $region65: #{tpu_custom_call.1} parent=0
    _
  %s8 = ssub.s32 1, %s6
  %s9 = scalar_select 0, %s8, %s6
  $region1: #{tpu_custom_call.1} parent=0
    #allocation2 [shape = 'u8[32768]{0}', space=vmem, size = 0x8000, scoped, tag = 'input window, operand 0']
    #allocation3 [shape = 's32[2]{0}', space=sflag, size = 0x8, scoped, tag = 'scoped memory for tpu_custom_call.1']
    #allocation4 [shape = 's32[2]{0}', space=sflag, size = 0x8, scoped, tag = 'scoped memory for tpu_custom_call.1']
    #allocation5 [shape = 'u8[32768]{0}', space=vmem, size = 0x8000, scoped, tag = 'input window, operand 1']
    #allocation6 [shape = 's32[2]{0}', space=sflag, size = 0x8, scoped, tag = 'scoped memory for tpu_custom_call.1']
    #allocation7 [shape = 'u8[32768]{0}', space=vmem, size = 0x8000, scoped, tag = 'input window, operand 2']
    #allocation8 [shape = 'u8[32768]{0}', space=vmem, size = 0x8000, scoped, tag = 'output window, operand 0']
    #allocation9 [shape = 'u8[32768]{0}', space=vmem, size = 0x8000, scoped, tag = 'output window, operand 1']
    #allocation10 [shape = 's32[2]{0}', space=sflag, size = 0x8, scoped, tag = 'scoped memory for tpu_custom_call.1']
    %10 = vsyncpa [#allocation3], 0
    %s11 = scalar_lea.sflag [#allocation3], 1
    %12 = vsyncpa %s11, 0
    %13 = vsyncpa [#allocation6], 0
    %s14 = scalar_lea.sflag [#allocation6], 1
    %15 = vsyncpa %s14, 0
    %16 = vsyncpa [#allocation4], 0
    %s17 = scalar_lea.sflag [#allocation4], 1
    %18 = vsyncpa %s17, 0
    %19 = vsyncpa [#allocation10], 0
    %s20 = scalar_lea.sflag [#allocation10], 1
    %21 = vsyncpa %s20, 0
    loop: start=0, step=1, limit=4
    $region2: #{tpu_custom_call.1} parent=1 // loop_pre_header
      _
    $region3: #{tpu_custom_call.1} parent=1 // loop_header
      %s23 = sphi 0, %s27
      %p24 = scmp.ge.s32.totalorder %s23, 4
      %s30 = sphi 0, %s42
      %s31 = sphi 0, %s38
      %s32 = sphi 0, %s30
      %s33 = sphi 0, %s31
      %s34 = sphi 0, %s32
      %s35 = sphi 0, %s33
      %s47 = sphi 0, %s49
      %s50 = sphi 0, %s47
      %s51 = sphi 0, %s50
      %s67 = sphi 0, %s51
      %s73 = sphi 0, %s75
      %s76 = sphi 0, %s73
      %s77 = sphi 0, %s76
      %s93 = sphi 0, %s77
      %s99 = sphi 0, %s101
      %s102 = sphi 0, %s99
      %s103 = sphi 0, %s102
      %s119 = sphi 0, %s103
      %s127 = sphi 0, %s129
      %s130 = sphi 0, %s127
      %s131 = sphi 0, %s130
      %s147 = sphi 0, %s131
      %s155 = sphi 0, %s157
      %s158 = sphi 0, %s155
      %s159 = sphi 0, %s158
      %s175 = sphi 0, %s159
    $region4: #{tpu_custom_call.1} parent=1 // loop_header_branch
      %26 = sbr.rel (%p24) target = $region8
    $region5: #{tpu_custom_call.1} parent=1 // loop_body
      %s28 = ssub.s32 %s23, 1
      %s29 = ssub.s32 %s23, 2
      %s36 = sadd.s32 1, %s31
      %p37 = scmp.ge.s32.totalorder %s36, 1
      %s38 = scalar_select %p37, 0, %s36
      %s39 = sadd.s32 1, %s30
      %s40 = scalar_select %p37, %s39, %s30
      %p41 = scmp.ge.s32.totalorder %s40, 2
      %s42 = scalar_select %p41, 0, %s40
      %s43 = ssub.s32 %s30, %s42
      %s44 = ssub.s32 %s31, %s38
      %s45 = sor.u32 %s43, %s44
      %p46 = scmp.eq.s32.totalorder %s45, 0
      %s48 = sadd.s32 %s47, 1
      %s49 = scalar_select %p46, %s47, %s48
      %p52 = pneg %p46
      %p53 = scmp.eq.s32.totalorder %s23, 1
      %p54 = por %p52, %p53
      %p55 = scmp.ne.s32.totalorder %s47, %s50
      %p56 = scmp.eq.s32.totalorder %s23, 0
      %p57 = por %p55, %p56
      %p58 = scmp.ne.s32.totalorder %s47, %s50
      %p59 = scmp.eq.s32.totalorder %s28, 1
      %p60 = por %p58, %p59
      %p61 = scmp.ne.s32.totalorder %s50, %s51
      %p62 = scmp.eq.s32.totalorder %s28, 0
      %p63 = por %p61, %p62
      %p64 = scmp.ne.s32.totalorder %s50, %s51
      %p65 = scmp.eq.s32.totalorder %s29, 1
      %p66 = por %p64, %p65
      %p68 = scmp.ne.s32.totalorder %s51, %s67
      %p69 = scmp.eq.s32.totalorder %s29, 0
      %p70 = por %p68, %p69
      %s71 = ssub.s32 %s30, %s42
      %p72 = scmp.eq.s32.totalorder %s71, 0
      %s74 = sadd.s32 %s73, 1
      %s75 = scalar_select %p72, %s73, %s74
      %p78 = pneg %p72
      %p79 = scmp.eq.s32.totalorder %s23, 1
      %p80 = por %p78, %p79
      %p81 = scmp.ne.s32.totalorder %s73, %s76
      %p82 = scmp.eq.s32.totalorder %s23, 0
      %p83 = por %p81, %p82
      %p84 = scmp.ne.s32.totalorder %s73, %s76
      %p85 = scmp.eq.s32.totalorder %s28, 1
      %p86 = por %p84, %p85
      %p87 = scmp.ne.s32.totalorder %s76, %s77
      %p88 = scmp.eq.s32.totalorder %s28, 0
      %p89 = por %p87, %p88
      %p90 = scmp.ne.s32.totalorder %s76, %s77
      %p91 = scmp.eq.s32.totalorder %s29, 1
      %p92 = por %p90, %p91
      %p94 = scmp.ne.s32.totalorder %s77, %s93
      %p95 = scmp.eq.s32.totalorder %s29, 0
      %p96 = por %p94, %p95
      %s97 = ssub.s32 %s30, %s42
      %p98 = scmp.eq.s32.totalorder %s97, 0
      %s100 = sadd.s32 %s99, 1
      %s101 = scalar_select %p98, %s99, %s100
      %p104 = pneg %p98
      %p105 = scmp.eq.s32.totalorder %s23, 1
      %p106 = por %p104, %p105
      %p107 = scmp.ne.s32.totalorder %s99, %s102
      %p108 = scmp.eq.s32.totalorder %s23, 0
      %p109 = por %p107, %p108
      %p110 = scmp.ne.s32.totalorder %s99, %s102
      %p111 = scmp.eq.s32.totalorder %s28, 1
      %p112 = por %p110, %p111
      %p113 = scmp.ne.s32.totalorder %s102, %s103
      %p114 = scmp.eq.s32.totalorder %s28, 0
      %p115 = por %p113, %p114
      %p116 = scmp.ne.s32.totalorder %s102, %s103
      %p117 = scmp.eq.s32.totalorder %s29, 1
      %p118 = por %p116, %p117
      %p120 = scmp.ne.s32.totalorder %s103, %s119
      %p121 = scmp.eq.s32.totalorder %s29, 0
      %p122 = por %p120, %p121
      %s123 = ssub.s32 %s30, %s42
      %s124 = ssub.s32 %s31, %s38
      %s125 = sor.u32 %s123, %s124
      %p126 = scmp.eq.s32.totalorder %s125, 0
      %s128 = sadd.s32 %s127, 1
      %s129 = scalar_select %p126, %s127, %s128
      %p132 = pneg %p126
      %p133 = scmp.eq.s32.totalorder %s23, 1
      %p134 = por %p132, %p133
      %p135 = scmp.ne.s32.totalorder %s127, %s130
      %p136 = scmp.eq.s32.totalorder %s23, 0
      %p137 = por %p135, %p136
      %p138 = scmp.ne.s32.totalorder %s127, %s130
      %p139 = scmp.eq.s32.totalorder %s28, 1
      %p140 = por %p138, %p139
      %p141 = scmp.ne.s32.totalorder %s130, %s131
      %p142 = scmp.eq.s32.totalorder %s28, 0
      %p143 = por %p141, %p142
      %p144 = scmp.ne.s32.totalorder %s130, %s131
      %p145 = scmp.eq.s32.totalorder %s29, 1
      %p146 = por %p144, %p145
      %p148 = scmp.ne.s32.totalorder %s131, %s147
      %p149 = scmp.eq.s32.totalorder %s29, 0
      %p150 = por %p148, %p149
      %s151 = ssub.s32 %s30, %s42
      %s152 = ssub.s32 %s31, %s38
      %s153 = sor.u32 %s151, %s152
      %p154 = scmp.eq.s32.totalorder %s153, 0
      %s156 = sadd.s32 %s155, 1
      %s157 = scalar_select %p154, %s155, %s156
      %p160 = pneg %p154
      %p161 = scmp.eq.s32.totalorder %s23, 1
      %p162 = por %p160, %p161
      %p163 = scmp.ne.s32.totalorder %s155, %s158
      %p164 = scmp.eq.s32.totalorder %s23, 0
      %p165 = por %p163, %p164
      %p166 = scmp.ne.s32.totalorder %s155, %s158
      %p167 = scmp.eq.s32.totalorder %s28, 1
      %p168 = por %p166, %p167
      %p169 = scmp.ne.s32.totalorder %s158, %s159
      %p170 = scmp.eq.s32.totalorder %s28, 0
      %p171 = por %p169, %p170
      %p172 = scmp.ne.s32.totalorder %s158, %s159
      %p173 = scmp.eq.s32.totalorder %s29, 1
      %p174 = por %p172, %p173
      %p176 = scmp.ne.s32.totalorder %s159, %s175
      %p177 = scmp.eq.s32.totalorder %s29, 0
      %p178 = por %p176, %p177
      %p179 = scmp.le.s32.totalorder 1, %s23
      %p180 = scmp.lt.s32.totalorder %s23, 3
      %p181 = pnand %p179, %p180
      %p182 = pneg %p181
      // Predicated region
      $region9: #{tpu_custom_call.1} parent=5 // pred_check
        _
      $region10: #{tpu_custom_call.1} parent=5 // pred_check_branch
        %184 = sbr.rel (%p181) target = $region12
      $region11: #{tpu_custom_call.1} parent=5 // pred_region
        %s185 = ssub.s32 %s23, 1
      $region12: #{tpu_custom_call.1} parent=5 // pred_fallthru
        _
      %p186 = scmp.lt.s32.totalorder %s23, 2
      // Predicated region
      $region13: #{tpu_custom_call.1} parent=5 // pred_check
        %p187 = pneg %p186
      $region14: #{tpu_custom_call.1} parent=5 // pred_check_branch
        %189 = sbr.rel (%p187) target = $region16
      $region15: #{tpu_custom_call.1} parent=5 // pred_region
        // Predicated region
        $region17: #{tpu_custom_call.1} parent=15 // pred_check
          %p190 = pneg %p57
        $region18: #{tpu_custom_call.1} parent=15 // pred_check_branch
          %192 = sbr.rel (%p190) target = $region20
        $region19: #{tpu_custom_call.1} parent=15 // pred_region
          %s193 = sand.u32 %s47, 1
          %s194 = scalar_lea.sflag [#allocation3], %s193
          %s195 = sand.u32 %s47, 1
          %s196 = smul.addr %s195, 32
          %s197 = scalar_lea.vmem [#allocation2], %s196
          %s198 = smul.u32 4, %s30
          %s200 = ssub.s32 512, 512
          %201 = vsyncadd %s194, %s200
          %s202 = sadd.s32 %s31, %s198
          %s203 = smul.addr %s202, 128
          %s204 = scalar_lea.hbm %s0, %s203
          %s205 = sshll.u32 %s197, 4
          %s206 = int_to_ptr.vmem [resolvable:$true] %s205
          %211 = dma.hbm_to_vmem [thread:$0]  %s204, 512, %s206, %s194, 128, 128, 8
        $region20: #{tpu_custom_call.1} parent=15 // pred_fallthru
          _
        // Predicated region
        $region21: #{tpu_custom_call.1} parent=15 // pred_check
          %p212 = pneg %p83
        $region22: #{tpu_custom_call.1} parent=15 // pred_check_branch
          %214 = sbr.rel (%p212) target = $region24
        $region23: #{tpu_custom_call.1} parent=15 // pred_region
          %s215 = sand.u32 %s23, 1
          %s216 = scalar_lea.sflag [#allocation6], %s215
          %s217 = sand.u32 %s73, 1
          %s218 = smul.addr %s217, 32
          %s219 = scalar_lea.vmem [#allocation5], %s218
          %s220 = smul.u32 4, %s30
          %s222 = ssub.s32 512, 512
          %223 = vsyncadd %s216, %s222
          %s224 = smul.addr %s220, 128
          %s225 = scalar_lea.hbm %s1, %s224
          %s226 = sshll.u32 %s219, 4
          %s227 = int_to_ptr.vmem [resolvable:$true] %s226
          %232 = dma.hbm_to_vmem [thread:$0]  %s225, 512, %s227, %s216, 128, 128, 8
        $region24: #{tpu_custom_call.1} parent=15 // pred_fallthru
          _
        // Predicated region
        $region25: #{tpu_custom_call.1} parent=15 // pred_check
          %p233 = pneg %p109
        $region26: #{tpu_custom_call.1} parent=15 // pred_check_branch
          %235 = sbr.rel (%p233) target = $region28
        $region27: #{tpu_custom_call.1} parent=15 // pred_region
          %s236 = sand.u32 %s23, 1
          %s237 = scalar_lea.sflag [#allocation6], %s236
          %s238 = sand.u32 %s99, 1
          %s239 = smul.addr %s238, 32
          %s240 = scalar_lea.vmem [#allocation7], %s239
          %s241 = smul.u32 4, %s30
          %s243 = ssub.s32 512, 512
          %244 = vsyncadd %s237, %s243
          %s245 = smul.addr %s241, 128
          %s246 = scalar_lea.hbm %s2, %s245
          %s247 = sshll.u32 %s240, 4
          %s248 = int_to_ptr.vmem [resolvable:$true] %s247
          %253 = dma.hbm_to_vmem [thread:$0]  %s246, 512, %s248, %s237, 128, 128, 8
        $region28: #{tpu_custom_call.1} parent=15 // pred_fallthru
          _
      $region16: #{tpu_custom_call.1} parent=5 // pred_fallthru
        _
      %p254 = scmp.le.s32.totalorder 1, %s23
      %p255 = scmp.lt.s32.totalorder %s23, 3
      %p256 = pnand %p254, %p255
      %p257 = pneg %p256
      // Predicated region
      $region29: #{tpu_custom_call.1} parent=5 // pred_check
        _
      $region30: #{tpu_custom_call.1} parent=5 // pred_check_branch
        %259 = sbr.rel (%p256) target = $region32
      $region31: #{tpu_custom_call.1} parent=5 // pred_region
        %s260 = ssub.s32 %s23, 1
        %s261 = sand.u32 %s50, 1
        %s262 = scalar_lea.sflag [#allocation3], %s261
        %s263 = sand.u32 %s50, 1
        %s264 = smul.addr %s263, 32
        %s265 = scalar_lea.vmem [#allocation2], %s264
        // Predicated region
        $region33: #{tpu_custom_call.1} parent=31 // pred_check
          %p266 = pneg %p63
        $region34: #{tpu_custom_call.1} parent=31 // pred_check_branch
          %268 = sbr.rel (%p266) target = $region36
        $region35: #{tpu_custom_call.1} parent=31 // pred_region
          %269 = dma.done %s262, 512
        $region36: #{tpu_custom_call.1} parent=31 // pred_fallthru
          _
        %s270 = sand.u32 %s28, 1
        %s271 = scalar_lea.sflag [#allocation6], %s270
        %s272 = sand.u32 %s76, 1
        %s273 = smul.addr %s272, 32
        %s274 = scalar_lea.vmem [#allocation5], %s273
        // Predicated region
        $region37: #{tpu_custom_call.1} parent=31 // pred_check
          %p275 = pneg %p89
        $region38: #{tpu_custom_call.1} parent=31 // pred_check_branch
          %277 = sbr.rel (%p275) target = $region40
        $region39: #{tpu_custom_call.1} parent=31 // pred_region
          %278 = dma.done %s271, 512
        $region40: #{tpu_custom_call.1} parent=31 // pred_fallthru
          _
        %s279 = sand.u32 %s28, 1
        %s280 = scalar_lea.sflag [#allocation6], %s279
        %s281 = sand.u32 %s102, 1
        %s282 = smul.addr %s281, 32
        %s283 = scalar_lea.vmem [#allocation7], %s282
        // Predicated region
        $region41: #{tpu_custom_call.1} parent=31 // pred_check
          %p284 = pneg %p115
        $region42: #{tpu_custom_call.1} parent=31 // pred_check_branch
          %286 = sbr.rel (%p284) target = $region44
        $region43: #{tpu_custom_call.1} parent=31 // pred_region
          %287 = dma.done %s280, 512
        $region44: #{tpu_custom_call.1} parent=31 // pred_fallthru
          _
        %s288 = sand.u32 %s50, 1
        %s289 = scalar_lea.sflag [#allocation3], %s288
        %s290 = sand.u32 %s50, 1
        %s291 = smul.addr %s290, 32
        %s292 = scalar_lea.vmem [#allocation2], %s291
        %p293 = pneg %p63
        %p294 = pneg %p60
        %s295 = sand.u32 %s28, 1
        %s296 = scalar_lea.sflag [#allocation6], %s295
        %s297 = sand.u32 %s76, 1
        %s298 = smul.addr %s297, 32
        %s299 = scalar_lea.vmem [#allocation5], %s298
        %p300 = pneg %p89
        %p301 = pneg %p86
        %s302 = sand.u32 %s28, 1
        %s303 = scalar_lea.sflag [#allocation6], %s302
        %s304 = sand.u32 %s102, 1
        %s305 = smul.addr %s304, 32
        %s306 = scalar_lea.vmem [#allocation7], %s305
        %p307 = pneg %p115
        %p308 = pneg %p112
        %p309 = pneg %p143
        %p310 = pneg %p140
        %s311 = sand.u32 %s130, 1
        %s312 = scalar_lea.sflag [#allocation4], %s311
        %s313 = sand.u32 %s130, 1
        %s314 = smul.addr %s313, 32
        %s315 = scalar_lea.vmem [#allocation8], %s314
        %p316 = pneg %p171
        %p317 = pneg %p168
        %s318 = sand.u32 %s158, 1
        %s319 = scalar_lea.sflag [#allocation10], %s318
        %s320 = sand.u32 %s158, 1
        %s321 = smul.addr %s320, 32
        %s322 = scalar_lea.vmem [#allocation9], %s321
        %s323 = smul.u32 4, %s32
        %s324 = smul.u32 4, %s32
        %s325 = smul.u32 4, %s32
        %s326 = smul.u32 4, %s32
        %s327 = smul.u32 4, %s32
        %v329 = vld [vmem:[%s265] sm:$0xff]
        %v330 = vld [vmem:[%s265 + $0x8] sm:$0xff]
        %v331 = vld [vmem:[%s265 + $0x10] sm:$0xff]
        %v332 = vld [vmem:[%s265 + $0x18] sm:$0xff]
        %v333 = vmul.f32 %v329, 0.17677669
        %v334 = vmul.f32 %v330, 0.17677669
        %v335 = vmul.f32 %v331, 0.17677669
        %v336 = vmul.f32 %v332, 0.17677669
        %v337 = vpack.c.bf16 %v333, %v333
        %v338 = vpack.c.bf16 %v334, %v334
        %v339 = vpack.c.bf16 %v335, %v335
        %v340 = vpack.c.bf16 %v336, %v336
        %v341 = vld [vmem:[%s274] sm:$0xff]
        %v342 = vld [vmem:[%s274 + $0x8] sm:$0xff]
        %v343 = vld [vmem:[%s274 + $0x10] sm:$0xff]
        %v344 = vld [vmem:[%s274 + $0x18] sm:$0xff]
        %v345 = vpack.c.bf16 %v341, %v341
        %v346 = vpack.c.bf16 %v342, %v342
        %v347 = vpack.c.bf16 %v343, %v343
        %v348 = vpack.c.bf16 %v344, %v344
        %v349 = vld [vmem:[%s283] sm:$0xff]
        %v350 = vld [vmem:[%s283 + $0x8] sm:$0xff]
        %v351 = vld [vmem:[%s283 + $0x10] sm:$0xff]
        %v352 = vld [vmem:[%s283 + $0x18] sm:$0xff]
        %v353 = vpack.c.bf16 %v349, %v349
        %v354 = vpack.c.bf16 %v350, %v350
        %v355 = vpack.c.bf16 %v351, %v351
        %v356 = vpack.c.bf16 %v352, %v352
        %vm357 = vcmask 261120
        %v359 = vsel %vm357, %v337, 0
        %v362 = vsel %vm357, %v345, 0
        %364 = vmatprep.subr.bf16.mxu0 0
        %365 = vmatpush1.bf16.xpose.msra.mxu0 0
        %366 = vmatprep.subr.bf16.mxu0 0
        %367 = vmatpush1.bf16.xpose.msra.mxu0 0
        %368 = vmatprep.subr.bf16.mxu0 0
        %369 = vmatpush1.bf16.xpose.msra.mxu0 0
        %370 = vmatprep.subr.bf16.mxu0 0
        %371 = vmatpush1.bf16.xpose.msra.mxu0 0
        %372 = vmatprep.subr.bf16.mxu0 0
        %373 = vmatpush1.bf16.xpose.msra.mxu0 0
        %374 = vmatprep.subr.bf16.mxu0 0
        %375 = vmatpush1.bf16.xpose.msra.mxu0 0
        %376 = vmatprep.subr.bf16.mxu0 0
        %377 = vmatpush1.bf16.xpose.msra.mxu0 0
        %378 = vmatprep.subr.bf16.mxu0 0
        %379 = vmatpush1.bf16.xpose.msra.mxu0 %v362
        %380 = vmatprep.subr.bf16.mxu0 0
        %381 = vmatpush2.bf16.xpose.msra.mxu0 0
        %382 = vmatprep.subr.bf16.mxu0 0
        %383 = vmatpush2.bf16.xpose.msra.mxu0 0
        %384 = vmatprep.subr.bf16.mxu0 0
        %385 = vmatpush2.bf16.xpose.msra.mxu0 0
        %386 = vmatprep.subr.bf16.mxu0 0
        %387 = vmatpush2.bf16.xpose.msra.mxu0 0
        %388 = vmatprep.subr.bf16.mxu0 0
        %389 = vmatpush2.bf16.xpose.msra.mxu0 0
        %390 = vmatprep.subr.bf16.mxu0 0
        %391 = vmatpush2.bf16.xpose.msra.mxu0 0
        %392 = vmatprep.subr.bf16.mxu0 0
        %393 = vmatpush2.bf16.xpose.msra.mxu0 0
        %394 = vmatprep.subr.bf16.mxu0 0
        %395 = vmatpush2.bf16.xpose.msra.mxu0 0
        %396 = vmatprep.mubr.bf16.mxu0 0
        %397 = vmatmul.mubr.bf16.gmra.mxu0 %v359
        %v398 = vpop.f32.mrf.mxu0
        %v399 = vadd.f32 0.0, %v398
        %v400 = vpop.f32.mrf.mxu0
        %v401 = vpop.f32.mrf.mxu0
        %v402 = vpop.f32.mrf.mxu0
        %403 = vdwg.mxu0
        %v405 = vsel %vm357, %v338, 0
        %v408 = vsel %vm357, %v346, 0
        %410 = vmatprep.subr.bf16.mxu0 0
        %411 = vmatpush1.bf16.xpose.msra.mxu0 0
        %412 = vmatprep.subr.bf16.mxu0 0
        %413 = vmatpush1.bf16.xpose.msra.mxu0 0
        %414 = vmatprep.subr.bf16.mxu0 0
        %415 = vmatpush1.bf16.xpose.msra.mxu0 0
        %416 = vmatprep.subr.bf16.mxu0 0
        %417 = vmatpush1.bf16.xpose.msra.mxu0 0
        %418 = vmatprep.subr.bf16.mxu0 0
        %419 = vmatpush1.bf16.xpose.msra.mxu0 0
        %420 = vmatprep.subr.bf16.mxu0 0
        %421 = vmatpush1.bf16.xpose.msra.mxu0 0
        %422 = vmatprep.subr.bf16.mxu0 0
        %423 = vmatpush1.bf16.xpose.msra.mxu0 0
        %424 = vmatprep.subr.bf16.mxu0 0
        %425 = vmatpush1.bf16.xpose.msra.mxu0 %v408
        %426 = vmatprep.subr.bf16.mxu0 0
        %427 = vmatpush2.bf16.xpose.msra.mxu0 0
        %428 = vmatprep.subr.bf16.mxu0 0
        %429 = vmatpush2.bf16.xpose.msra.mxu0 0
        %430 = vmatprep.subr.bf16.mxu0 0
        %431 = vmatpush2.bf16.xpose.msra.mxu0 0
        %432 = vmatprep.subr.bf16.mxu0 0
        %433 = vmatpush2.bf16.xpose.msra.mxu0 0
        %434 = vmatprep.subr.bf16.mxu0 0
        %435 = vmatpush2.bf16.xpose.msra.mxu0 0
        %436 = vmatprep.subr.bf16.mxu0 0
        %437 = vmatpush2.bf16.xpose.msra.mxu0 0
        %438 = vmatprep.subr.bf16.mxu0 0
        %439 = vmatpush2.bf16.xpose.msra.mxu0 0
        %440 = vmatprep.subr.bf16.mxu0 0
        %441 = vmatpush2.bf16.xpose.msra.mxu0 0
        %442 = vmatprep.mubr.bf16.mxu0 0
        %443 = vmatmul.mubr.bf16.gmra.mxu0 %v405
        %v444 = vpop.f32.mrf.mxu0
        %v445 = vadd.f32 0.0, %v444
        %v446 = vpop.f32.mrf.mxu0
        %v447 = vpop.f32.mrf.mxu0
        %v448 = vpop.f32.mrf.mxu0
        %449 = vdwg.mxu0
        %v451 = vsel %vm357, %v339, 0
        %v454 = vsel %vm357, %v347, 0
        %456 = vmatprep.subr.bf16.mxu0 0
        %457 = vmatpush1.bf16.xpose.msra.mxu0 0
        %458 = vmatprep.subr.bf16.mxu0 0
        %459 = vmatpush1.bf16.xpose.msra.mxu0 0
        %460 = vmatprep.subr.bf16.mxu0 0
        %461 = vmatpush1.bf16.xpose.msra.mxu0 0
        %462 = vmatprep.subr.bf16.mxu0 0
        %463 = vmatpush1.bf16.xpose.msra.mxu0 0
        %464 = vmatprep.subr.bf16.mxu0 0
        %465 = vmatpush1.bf16.xpose.msra.mxu0 0
        %466 = vmatprep.subr.bf16.mxu0 0
        %467 = vmatpush1.bf16.xpose.msra.mxu0 0
        %468 = vmatprep.subr.bf16.mxu0 0
        %469 = vmatpush1.bf16.xpose.msra.mxu0 0
        %470 = vmatprep.subr.bf16.mxu0 0
        %471 = vmatpush1.bf16.xpose.msra.mxu0 %v454
        %472 = vmatprep.subr.bf16.mxu0 0
        %473 = vmatpush2.bf16.xpose.msra.mxu0 0
        %474 = vmatprep.subr.bf16.mxu0 0
        %475 = vmatpush2.bf16.xpose.msra.mxu0 0
        %476 = vmatprep.subr.bf16.mxu0 0
        %477 = vmatpush2.bf16.xpose.msra.mxu0 0
        %478 = vmatprep.subr.bf16.mxu0 0
        %479 = vmatpush2.bf16.xpose.msra.mxu0 0
        %480 = vmatprep.subr.bf16.mxu0 0
        %481 = vmatpush2.bf16.xpose.msra.mxu0 0
        %482 = vmatprep.subr.bf16.mxu0 0
        %483 = vmatpush2.bf16.xpose.msra.mxu0 0
        %484 = vmatprep.subr.bf16.mxu0 0
        %485 = vmatpush2.bf16.xpose.msra.mxu0 0
        %486 = vmatprep.subr.bf16.mxu0 0
        %487 = vmatpush2.bf16.xpose.msra.mxu0 0
        %488 = vmatprep.mubr.bf16.mxu0 0
        %489 = vmatmul.mubr.bf16.gmra.mxu0 %v451
        %v490 = vpop.f32.mrf.mxu0
        %v491 = vadd.f32 0.0, %v490
        %v492 = vpop.f32.mrf.mxu0
        %v493 = vpop.f32.mrf.mxu0
        %v494 = vpop.f32.mrf.mxu0
        %495 = vdwg.mxu0
        %v497 = vsel %vm357, %v340, 0
        %v500 = vsel %vm357, %v348, 0
        %502 = vmatprep.subr.bf16.mxu0 0
        %503 = vmatpush1.bf16.xpose.msra.mxu0 0
        %504 = vmatprep.subr.bf16.mxu0 0
        %505 = vmatpush1.bf16.xpose.msra.mxu0 0
        %506 = vmatprep.subr.bf16.mxu0 0
        %507 = vmatpush1.bf16.xpose.msra.mxu0 0
        %508 = vmatprep.subr.bf16.mxu0 0
        %509 = vmatpush1.bf16.xpose.msra.mxu0 0
        %510 = vmatprep.subr.bf16.mxu0 0
        %511 = vmatpush1.bf16.xpose.msra.mxu0 0
        %512 = vmatprep.subr.bf16.mxu0 0
        %513 = vmatpush1.bf16.xpose.msra.mxu0 0
        %514 = vmatprep.subr.bf16.mxu0 0
        %515 = vmatpush1.bf16.xpose.msra.mxu0 0
        %516 = vmatprep.subr.bf16.mxu0 0
        %517 = vmatpush1.bf16.xpose.msra.mxu0 %v500
        %518 = vmatprep.subr.bf16.mxu0 0
        %519 = vmatpush2.bf16.xpose.msra.mxu0 0
        %520 = vmatprep.subr.bf16.mxu0 0
        %521 = vmatpush2.bf16.xpose.msra.mxu0 0
        %522 = vmatprep.subr.bf16.mxu0 0
        %523 = vmatpush2.bf16.xpose.msra.mxu0 0
        %524 = vmatprep.subr.bf16.mxu0 0
        %525 = vmatpush2.bf16.xpose.msra.mxu0 0
        %526 = vmatprep.subr.bf16.mxu0 0
        %527 = vmatpush2.bf16.xpose.msra.mxu0 0
        %528 = vmatprep.subr.bf16.mxu0 0
        %529 = vmatpush2.bf16.xpose.msra.mxu0 0
        %530 = vmatprep.subr.bf16.mxu0 0
        %531 = vmatpush2.bf16.xpose.msra.mxu0 0
        %532 = vmatprep.subr.bf16.mxu0 0
        %533 = vmatpush2.bf16.xpose.msra.mxu0 0
        %534 = vmatprep.mubr.bf16.mxu0 0
        %535 = vmatmul.mubr.bf16.gmra.mxu0 %v497
        %v536 = vpop.f32.mrf.mxu0
        %v537 = vadd.f32 0.0, %v536
        %v538 = vpop.f32.mrf.mxu0
        %v539 = vpop.f32.mrf.mxu0
        %v540 = vpop.f32.mrf.mxu0
        %541 = vdwg.mxu0
        %vm542 = vcmask 64512
        %v543 = vsel %vm542, %v399, -inf
        %544 = vmax.xlane.f32.xlu0 %v543
        %v545 = vpop.xlane.xlu0 %544
        %v546 = vsel %vm542, %v445, -inf
        %547 = vmax.xlane.f32.xlu0 %v546
        %v548 = vpop.xlane.xlu0 %547
        %v549 = vsel %vm542, %v491, -inf
        %550 = vmax.xlane.f32.xlu0 %v549
        %v551 = vpop.xlane.xlu0 %550
        %v552 = vsel %vm542, %v537, -inf
        %553 = vmax.xlane.f32.xlu0 %v552
        %v554 = vpop.xlane.xlu0 %553
        %v555 = vsub.f32 %v399, %v545
        %v556 = vsub.f32 %v445, %v548
        %v557 = vsub.f32 %v491, %v551
        %v558 = vsub.f32 %v537, %v554
        %v559 = vmul.f32 %v555, 1.442695
        %v560 = vpow.pop %v559
        %v561 = vmul.f32 %v556, 1.442695
        %v562 = vpow.pop %v561
        %v563 = vmul.f32 %v557, 1.442695
        %v564 = vpow.pop %v563
        %v565 = vmul.f32 %v558, 1.442695
        %v566 = vpow.pop %v565
        %v567 = vsel %vm542, %v560, 0.0
        %568 = vadd.xlane.f32.xlu0 %v567
        %v569 = vpop.xlane.xlu0 %568
        %v570 = vsel %vm542, %v562, 0.0
        %571 = vadd.xlane.f32.xlu0 %v570
        %v572 = vpop.xlane.xlu0 %571
        %v573 = vsel %vm542, %v564, 0.0
        %574 = vadd.xlane.f32.xlu0 %v573
        %v575 = vpop.xlane.xlu0 %574
        %v576 = vsel %vm542, %v566, 0.0
        %577 = vadd.xlane.f32.xlu0 %v576
        %v578 = vpop.xlane.xlu0 %577
        %v579 = vrcp.pop %v569
        %v580 = vrcp.pop %v572
        %v581 = vrcp.pop %v575
        %v582 = vrcp.pop %v578
        %v583 = vpack.c.bf16 %v560, %v560
        %v584 = vpack.c.bf16 %v562, %v562
        %v585 = vpack.c.bf16 %v564, %v564
        %v586 = vpack.c.bf16 %v566, %v566
        %v588 = vsel %vm542, %v583, 0
        %vm590 = vcmask 1043456
        %v592 = vsel %vm590, %v353, 0
        %594 = vmatprep.subr.bf16.mxu0 0
        %595 = vmatpush1.bf16.msra.mxu0 0
        %596 = vmatprep.subr.bf16.mxu0 0
        %597 = vmatpush1.bf16.msra.mxu0 0
        %598 = vmatprep.subr.bf16.mxu0 0
        %599 = vmatpush1.bf16.msra.mxu0 0
        %600 = vmatprep.subr.bf16.mxu0 0
        %601 = vmatpush1.bf16.msra.mxu0 0
        %602 = vmatprep.subr.bf16.mxu0 0
        %603 = vmatpush1.bf16.msra.mxu0 0
        %604 = vmatprep.subr.bf16.mxu0 0
        %605 = vmatpush1.bf16.msra.mxu0 0
        %606 = vmatprep.subr.bf16.mxu0 0
        %607 = vmatpush1.bf16.msra.mxu0 0
        %608 = vmatprep.subr.bf16.mxu0 0
        %609 = vmatpush1.bf16.msra.mxu0 %v592
        %610 = vmatprep.subr.bf16.mxu0 0
        %611 = vmatpush2.bf16.msra.mxu0 0
        %612 = vmatprep.subr.bf16.mxu0 0
        %613 = vmatpush2.bf16.msra.mxu0 0
        %614 = vmatprep.subr.bf16.mxu0 0
        %615 = vmatpush2.bf16.msra.mxu0 0
        %616 = vmatprep.subr.bf16.mxu0 0
        %617 = vmatpush2.bf16.msra.mxu0 0
        %618 = vmatprep.subr.bf16.mxu0 0
        %619 = vmatpush2.bf16.msra.mxu0 0
        %620 = vmatprep.subr.bf16.mxu0 0
        %621 = vmatpush2.bf16.msra.mxu0 0
        %622 = vmatprep.subr.bf16.mxu0 0
        %623 = vmatpush2.bf16.msra.mxu0 0
        %624 = vmatprep.subr.bf16.mxu0 0
        %625 = vmatpush2.bf16.msra.mxu0 0
        %626 = vmatprep.mubr.bf16.mxu0 0
        %627 = vmatmul.mubr.bf16.gmra.mxu0 %v588
        %v628 = vpop.f32.mrf.mxu0
        %v629 = vadd.f32 0.0, %v628
        %v630 = vpop.f32.mrf.mxu0
        %v631 = vpop.f32.mrf.mxu0
        %v632 = vpop.f32.mrf.mxu0
        %633 = vdwg.mxu0
        %v635 = vsel %vm542, %v584, 0
        %v638 = vsel %vm590, %v354, 0
        %640 = vmatprep.subr.bf16.mxu0 0
        %641 = vmatpush1.bf16.msra.mxu0 0
        %642 = vmatprep.subr.bf16.mxu0 0
        %643 = vmatpush1.bf16.msra.mxu0 0
        %644 = vmatprep.subr.bf16.mxu0 0
        %645 = vmatpush1.bf16.msra.mxu0 0
        %646 = vmatprep.subr.bf16.mxu0 0
        %647 = vmatpush1.bf16.msra.mxu0 0
        %648 = vmatprep.subr.bf16.mxu0 0
        %649 = vmatpush1.bf16.msra.mxu0 0
        %650 = vmatprep.subr.bf16.mxu0 0
        %651 = vmatpush1.bf16.msra.mxu0 0
        %652 = vmatprep.subr.bf16.mxu0 0
        %653 = vmatpush1.bf16.msra.mxu0 0
        %654 = vmatprep.subr.bf16.mxu0 0
        %655 = vmatpush1.bf16.msra.mxu0 %v638
        %656 = vmatprep.subr.bf16.mxu0 0
        %657 = vmatpush2.bf16.msra.mxu0 0
        %658 = vmatprep.subr.bf16.mxu0 0
        %659 = vmatpush2.bf16.msra.mxu0 0
        %660 = vmatprep.subr.bf16.mxu0 0
        %661 = vmatpush2.bf16.msra.mxu0 0
        %662 = vmatprep.subr.bf16.mxu0 0
        %663 = vmatpush2.bf16.msra.mxu0 0
        %664 = vmatprep.subr.bf16.mxu0 0
        %665 = vmatpush2.bf16.msra.mxu0 0
        %666 = vmatprep.subr.bf16.mxu0 0
        %667 = vmatpush2.bf16.msra.mxu0 0
        %668 = vmatprep.subr.bf16.mxu0 0
        %669 = vmatpush2.bf16.msra.mxu0 0
        %670 = vmatprep.subr.bf16.mxu0 0
        %671 = vmatpush2.bf16.msra.mxu0 0
        %672 = vmatprep.mubr.bf16.mxu0 0
        %673 = vmatmul.mubr.bf16.gmra.mxu0 %v635
        %v674 = vpop.f32.mrf.mxu0
        %v675 = vadd.f32 0.0, %v674
        %v676 = vpop.f32.mrf.mxu0
        %v677 = vpop.f32.mrf.mxu0
        %v678 = vpop.f32.mrf.mxu0
        %679 = vdwg.mxu0
        %v681 = vsel %vm542, %v585, 0
        %v684 = vsel %vm590, %v355, 0
        %686 = vmatprep.subr.bf16.mxu0 0
        %687 = vmatpush1.bf16.msra.mxu0 0
        %688 = vmatprep.subr.bf16.mxu0 0
        %689 = vmatpush1.bf16.msra.mxu0 0
        %690 = vmatprep.subr.bf16.mxu0 0
        %691 = vmatpush1.bf16.msra.mxu0 0
        %692 = vmatprep.subr.bf16.mxu0 0
        %693 = vmatpush1.bf16.msra.mxu0 0
        %694 = vmatprep.subr.bf16.mxu0 0
        %695 = vmatpush1.bf16.msra.mxu0 0
        %696 = vmatprep.subr.bf16.mxu0 0
        %697 = vmatpush1.bf16.msra.mxu0 0
        %698 = vmatprep.subr.bf16.mxu0 0
        %699 = vmatpush1.bf16.msra.mxu0 0
        %700 = vmatprep.subr.bf16.mxu0 0
        %701 = vmatpush1.bf16.msra.mxu0 %v684
        %702 = vmatprep.subr.bf16.mxu0 0
        %703 = vmatpush2.bf16.msra.mxu0 0
        %704 = vmatprep.subr.bf16.mxu0 0
        %705 = vmatpush2.bf16.msra.mxu0 0
        %706 = vmatprep.subr.bf16.mxu0 0
        %707 = vmatpush2.bf16.msra.mxu0 0
        %708 = vmatprep.subr.bf16.mxu0 0
        %709 = vmatpush2.bf16.msra.mxu0 0
        %710 = vmatprep.subr.bf16.mxu0 0
        %711 = vmatpush2.bf16.msra.mxu0 0
        %712 = vmatprep.subr.bf16.mxu0 0
        %713 = vmatpush2.bf16.msra.mxu0 0
        %714 = vmatprep.subr.bf16.mxu0 0
        %715 = vmatpush2.bf16.msra.mxu0 0
        %716 = vmatprep.subr.bf16.mxu0 0
        %717 = vmatpush2.bf16.msra.mxu0 0
        %718 = vmatprep.mubr.bf16.mxu0 0
        %719 = vmatmul.mubr.bf16.gmra.mxu0 %v681
        %v720 = vpop.f32.mrf.mxu0
        %v721 = vadd.f32 0.0, %v720
        %v722 = vpop.f32.mrf.mxu0
        %v723 = vpop.f32.mrf.mxu0
        %v724 = vpop.f32.mrf.mxu0
        %725 = vdwg.mxu0
        %v727 = vsel %vm542, %v586, 0
        %v730 = vsel %vm590, %v356, 0
        %732 = vmatprep.subr.bf16.mxu0 0
        %733 = vmatpush1.bf16.msra.mxu0 0
        %734 = vmatprep.subr.bf16.mxu0 0
        %735 = vmatpush1.bf16.msra.mxu0 0
        %736 = vmatprep.subr.bf16.mxu0 0
        %737 = vmatpush1.bf16.msra.mxu0 0
        %738 = vmatprep.subr.bf16.mxu0 0
        %739 = vmatpush1.bf16.msra.mxu0 0
        %740 = vmatprep.subr.bf16.mxu0 0
        %741 = vmatpush1.bf16.msra.mxu0 0
        %742 = vmatprep.subr.bf16.mxu0 0
        %743 = vmatpush1.bf16.msra.mxu0 0
        %744 = vmatprep.subr.bf16.mxu0 0
        %745 = vmatpush1.bf16.msra.mxu0 0
        %746 = vmatprep.subr.bf16.mxu0 0
        %747 = vmatpush1.bf16.msra.mxu0 %v730
        %748 = vmatprep.subr.bf16.mxu0 0
        %749 = vmatpush2.bf16.msra.mxu0 0
        %750 = vmatprep.subr.bf16.mxu0 0
        %751 = vmatpush2.bf16.msra.mxu0 0
        %752 = vmatprep.subr.bf16.mxu0 0
        %753 = vmatpush2.bf16.msra.mxu0 0
        %754 = vmatprep.subr.bf16.mxu0 0
        %755 = vmatpush2.bf16.msra.mxu0 0
        %756 = vmatprep.subr.bf16.mxu0 0
        %757 = vmatpush2.bf16.msra.mxu0 0
        %758 = vmatprep.subr.bf16.mxu0 0
        %759 = vmatpush2.bf16.msra.mxu0 0
        %760 = vmatprep.subr.bf16.mxu0 0
        %761 = vmatpush2.bf16.msra.mxu0 0
        %762 = vmatprep.subr.bf16.mxu0 0
        %763 = vmatpush2.bf16.msra.mxu0 0
        %764 = vmatprep.mubr.bf16.mxu0 0
        %765 = vmatmul.mubr.bf16.gmra.mxu0 %v727
        %v766 = vpop.f32.mrf.mxu0
        %v767 = vadd.f32 0.0, %v766
        %v768 = vpop.f32.mrf.mxu0
        %v769 = vpop.f32.mrf.mxu0
        %v770 = vpop.f32.mrf.mxu0
        %771 = vdwg.mxu0
        %v772 = vmul.f32 %v629, %v579
        %v773 = vmul.f32 %v675, %v580
        %v774 = vmul.f32 %v721, %v581
        %v775 = vmul.f32 %v767, %v582
        %776 = vst.msk [vmem:[%s315] sm:$0xff] %vm357, %v772
        %777 = vst.msk [vmem:[%s315 + $0x8] sm:$0xff] %vm357, %v773
        %778 = vst.msk [vmem:[%s315 + $0x10] sm:$0xff] %vm357, %v774
        %779 = vst.msk [vmem:[%s315 + $0x18] sm:$0xff] %vm357, %v775
        %v780 = vmul.f32 %v560, %v579
        %v781 = vmul.f32 %v562, %v580
        %v782 = vmul.f32 %v564, %v581
        %v783 = vmul.f32 %v566, %v582
        %784 = vst.msk [vmem:[%s322] sm:$0xff] %vm542, %v780
        %785 = vst.msk [vmem:[%s322 + $0x8] sm:$0xff] %vm542, %v781
        %786 = vst.msk [vmem:[%s322 + $0x10] sm:$0xff] %vm542, %v782
        %787 = vst.msk [vmem:[%s322 + $0x18] sm:$0xff] %vm542, %v783
        %s788 = sand.u32 %s130, 1
        %s789 = scalar_lea.sflag [#allocation4], %s788
        %s790 = sand.u32 %s130, 1
        %s791 = smul.addr %s790, 32
        %s792 = scalar_lea.vmem [#allocation8], %s791
        %s793 = sand.u32 %s158, 1
        %s794 = scalar_lea.sflag [#allocation10], %s793
        %s795 = sand.u32 %s158, 1
        %s796 = smul.addr %s795, 32
        %s797 = scalar_lea.vmem [#allocation9], %s796
        // Predicated region
        $region45: #{tpu_custom_call.1} parent=31 // pred_check
          %p798 = pneg %p140
        $region46: #{tpu_custom_call.1} parent=31 // pred_check_branch
          %800 = sbr.rel (%p798) target = $region48
        $region47: #{tpu_custom_call.1} parent=31 // pred_region
          %s801 = smul.u32 4, %s32
          %s803 = ssub.s32 512, 512
          %804 = vsyncadd %s789, %s803
          %s805 = sadd.s32 %s33, %s801
          %s806 = smul.addr %s805, 128
          %s807 = scalar_lea.hbm %s3, %s806
          %s808 = sshll.u32 %s792, 4
          %s809 = int_to_ptr.vmem [resolvable:$true] %s808
          %814 = dma.vmem_to_hbm [thread:$0]  %s809, 512, %s807, %s789, 128, 128, 8
        $region48: #{tpu_custom_call.1} parent=31 // pred_fallthru
          _
        // Predicated region
        $region49: #{tpu_custom_call.1} parent=31 // pred_check
          %p815 = pneg %p168
        $region50: #{tpu_custom_call.1} parent=31 // pred_check_branch
          %817 = sbr.rel (%p815) target = $region52
        $region51: #{tpu_custom_call.1} parent=31 // pred_region
          %s818 = smul.u32 4, %s32
          %s820 = ssub.s32 512, 512
          %821 = vsyncadd %s794, %s820
          %s822 = sadd.s32 %s33, %s818
          %s823 = smul.addr %s822, 128
          %s824 = scalar_lea.hbm %s4, %s823
          %s825 = sshll.u32 %s797, 4
          %s826 = int_to_ptr.vmem [resolvable:$true] %s825
          %831 = dma.vmem_to_hbm [thread:$0]  %s826, 512, %s824, %s794, 128, 128, 8
        $region52: #{tpu_custom_call.1} parent=31 // pred_fallthru
          _
      $region32: #{tpu_custom_call.1} parent=5 // pred_fallthru
        _
      %p832 = scmp.le.s32.totalorder 2, %s23
      // Predicated region
      $region53: #{tpu_custom_call.1} parent=5 // pred_check
        %p833 = pneg %p832
      $region54: #{tpu_custom_call.1} parent=5 // pred_check_branch
        %835 = sbr.rel (%p833) target = $region56
      $region55: #{tpu_custom_call.1} parent=5 // pred_region
        %s836 = ssub.s32 %s23, 2
        // Predicated region
        $region57: #{tpu_custom_call.1} parent=55 // pred_check
          %p837 = pneg %p146
        $region58: #{tpu_custom_call.1} parent=55 // pred_check_branch
          %839 = sbr.rel (%p837) target = $region60
        $region59: #{tpu_custom_call.1} parent=55 // pred_region
          %s840 = sand.u32 %s131, 1
          %s841 = scalar_lea.sflag [#allocation4], %s840
          %s842 = sand.u32 %s131, 1
          %s843 = smul.addr %s842, 32
          %s844 = scalar_lea.vmem [#allocation8], %s843
          %845 = dma.done %s841, 512
        $region60: #{tpu_custom_call.1} parent=55 // pred_fallthru
          _
        // Predicated region
        $region61: #{tpu_custom_call.1} parent=55 // pred_check
          %p846 = pneg %p174
        $region62: #{tpu_custom_call.1} parent=55 // pred_check_branch
          %848 = sbr.rel (%p846) target = $region64
        $region63: #{tpu_custom_call.1} parent=55 // pred_region
          %s849 = sand.u32 %s159, 1
          %s850 = scalar_lea.sflag [#allocation10], %s849
          %s851 = sand.u32 %s159, 1
          %s852 = smul.addr %s851, 32
          %s853 = scalar_lea.vmem [#allocation9], %s852
          %854 = dma.done %s850, 512
        $region64: #{tpu_custom_call.1} parent=55 // pred_fallthru
          _
      $region56: #{tpu_custom_call.1} parent=5 // pred_fallthru
        _
    $region6: #{tpu_custom_call.1} parent=1 // loop_footer
      %s27 = sadd.s32 1, %s23
    $region7: #{tpu_custom_call.1} parent=1 // loop_footer_branch
      %22 = sbr.rel target = $region3
    $region8: #{tpu_custom_call.1} parent=1 // loop_exit
      _
    %855 = vsyncpa [#allocation3], 1
    %s856 = scalar_lea.sflag [#allocation3], 1
    %857 = vsyncpa %s856, 1
    %858 = vsyncpa [#allocation6], 1
    %s859 = scalar_lea.sflag [#allocation6], 1
    %860 = vsyncpa %s859, 1
    %861 = vsyncpa [#allocation4], 1
    %s862 = scalar_lea.sflag [#allocation4], 1
    %863 = vsyncpa %s862, 1
    %864 = vsyncpa [#allocation10], 1
    %s865 = scalar_lea.sflag [#allocation10], 1
    %866 = vsyncpa %s865, 1

</llo_original>
